<compile_context>
chip_gen: v7x
topology: tpu7x:2x2x1
jax: 0.10.0
libtpu: 0.0.40
codegen_flags: <defaults>
</compile_context>

<pallas_src>
import jax
import jax.numpy as jnp
from jax.experimental import pallas as pl
from jax.experimental.pallas import tpu as pltpu


def _linear_T(w_ref, b_ref, h):
    """y = W @ h + b as unrolled VPU broadcast-FMAs (no MXU).

    w_ref: (out, in), b_ref: (out, 1), h: (in, TB) -> (out, TB)."""
    w = w_ref[...]
    b = b_ref[...]
    in_dim = w.shape[1]
    acc = b + w[:, 0:1] * h[0:1, :]
    for k in range(1, in_dim):
        acc = acc + w[:, k:k + 1] * h[k:k + 1, :]
    return acc


def policy_network_kernel(xT_ref,
                          w1_ref, b1_ref,
                          w2_ref, b2_ref,
                          w3_ref, b3_ref,
                          wh_ref, bh_ref,        # fused [action; advantage] head
                          policyT_ref, valueT_ref):
    x = xT_ref[...]                               # (obs, TB), batch on lanes

    # core MLP: tanh(L1), tanh(L2), L3 (no activation on last layer)
    h = jnp.tanh(_linear_T(w1_ref, b1_ref, x))
    h = jnp.tanh(_linear_T(w2_ref, b2_ref, h))
    inter = _linear_T(w3_ref, b3_ref, h)
    t = jnp.tanh(inter)

    # fused heads: rows [0, A) = action scores, rows [A, 2A) = advantages
    heads = _linear_T(wh_ref, bh_ref, t)          # (2A, TB)
    A = policyT_ref.shape[0]
    scores = heads[0:A, :]
    adv = heads[A:2 * A, :]

    # softmax over actions (feature axis = sublanes)
    m = jnp.max(scores, axis=0, keepdims=True)    # (1, TB)
    e = jnp.exp(scores - m)
    s = jnp.sum(e, axis=0, keepdims=True)
    policyT_ref[...] = e * pl.reciprocal(s, approx=False)

    # value = max over advantages
    valueT_ref[...] = jnp.max(adv, axis=0, keepdims=True)


def _round_up(x, m):
    return ((x + m - 1) // m) * m


@jax.jit
def policy_network_forward(x, params):
    """x: (B, obs) float32.  Returns (policy (B, A), value (B,))."""
    w1, b1, w2, b2, w3, b3, wh, bh = params
    B, obs = x.shape
    A = wh.shape[0] // 2

    LANE = 128
    TB = min(1024, _round_up(B, LANE))            # batch tile = lane width
    B_pad = _round_up(B, TB)

    # pad batch and transpose so batch is the lane (last) dim
    xT = jnp.pad(x, ((0, B_pad - B), (0, 0))).T   # (obs, B_pad)

    def full(a):  # whole (tiny) array resident in VMEM across all grid steps
        return pl.BlockSpec(a.shape, lambda i: (0, 0))

    in_specs = [
        pl.BlockSpec((obs, TB), lambda i: (0, i)),
        full(w1), full(b1), full(w2), full(b2), full(w3), full(b3),
        full(wh), full(bh),
    ]
    out_specs = (
        pl.BlockSpec((A, TB), lambda i: (0, i)),
        pl.BlockSpec((1, TB), lambda i: (0, i)),
    )
    out_shape = (
        jax.ShapeDtypeStruct((A, B_pad), jnp.float32),
        jax.ShapeDtypeStruct((1, B_pad), jnp.float32),
    )

    policyT, valueT = pl.pallas_call(
        policy_network_kernel,
        grid=(B_pad // TB,),
        in_specs=in_specs,
        out_specs=out_specs,
        out_shape=out_shape,
        compiler_params=pltpu.CompilerParams(
            dimension_semantics=("parallel",)),
    )(xT, w1, b1, w2, b2, w3, b3, wh, bh)

    policy = policyT[:, :B].T                     # (B, A)
    value = valueT[0, :B]                         # (B,)
    return policy, value


def init_linear(key, in_dim, out_dim):
    """PyTorch-style nn.Linear init. Returns W (out, in), b (out, 1)."""
    kw, kb = jax.random.split(key)
    bound = 1.0 / (in_dim ** 0.5)
    w = jax.random.uniform(kw, (out_dim, in_dim), jnp.float32, -bound, bound)
    b = jax.random.uniform(kb, (out_dim, 1), jnp.float32, -bound, bound)
    return w, b


def init_policy_network(key, num_actions, obs_dim=4):
    ks = jax.random.split(key, 5)
    w1, b1 = init_linear(ks[0], obs_dim, 4)       # core L1
    w2, b2 = init_linear(ks[1], 4, 4)             # core L2
    w3, b3 = init_linear(ks[2], 4, 4)             # core L3
    wa, ba = init_linear(ks[3], 4, num_actions)   # action head
    wv, bv = init_linear(ks[4], 4, num_actions)   # advantage head
    # fuse the two heads -> single accumulation + single pair of input refs
    wh = jnp.concatenate([wa, wv], axis=0)        # (2A, 4)
    bh = jnp.concatenate([ba, bv], axis=0)        # (2A, 1)
    return (w1, b1, w2, b2, w3, b3, wh, bh)


if __name__ == "__main__":
    num_actions = 4
    batch = 4
    obs_dim = 4

    key = jax.random.PRNGKey(0)
    kp, kx = jax.random.split(key)
    params = init_policy_network(kp, num_actions, obs_dim)
    x = jax.random.normal(kx, (batch, obs_dim), jnp.float32)

    policy, value = policy_network_forward(x, params)
    jax.block_until_ready((policy, value))

    # pure-JAX reference
    def ref_forward(x, params):
        w1, b1, w2, b2, w3, b3, wh, bh = params
        lin = lambda w, b, h: h @ w.T + b.T
        h = jnp.tanh(lin(w1, b1, x))
        h = jnp.tanh(lin(w2, b2, h))
        t = jnp.tanh(lin(w3, b3, h))
        heads = lin(wh, bh, t)                    # (B, 2A)
        A = wh.shape[0] // 2
        pol = jax.nn.softmax(heads[:, :A], axis=1)
        val = jnp.max(heads[:, A:], axis=1)
        return pol, val

    ref_pol, ref_val = ref_forward(x, params)
    assert policy.shape == (batch, num_actions)
    assert value.shape == (batch,)
    assert jnp.allclose(policy, ref_pol, atol=1e-5, rtol=1e-5)
    assert jnp.allclose(value, ref_val, atol=1e-5, rtol=1e-5)
    assert jnp.allclose(jnp.sum(policy, axis=1), 1.0, atol=1e-5)

    print("KERNEL_OK")
</pallas_src>

<mosaic_0001>
module attributes {stable_mosaic.version = 11 : i64} {
  func.func @policy_network_kernel(%arg0: i32, %arg1: memref<4x128xf32, #tpu.memory_space<vmem>>, %arg2: memref<4x4xf32, #tpu.memory_space<vmem>>, %arg3: memref<4x1xf32, #tpu.memory_space<vmem>>, %arg4: memref<4x4xf32, #tpu.memory_space<vmem>>, %arg5: memref<4x1xf32, #tpu.memory_space<vmem>>, %arg6: memref<4x4xf32, #tpu.memory_space<vmem>>, %arg7: memref<4x1xf32, #tpu.memory_space<vmem>>, %arg8: memref<8x4xf32, #tpu.memory_space<vmem>>, %arg9: memref<8x1xf32, #tpu.memory_space<vmem>>, %arg10: memref<4x128xf32, #tpu.memory_space<vmem>>, %arg11: memref<1x128xf32, #tpu.memory_space<vmem>>) attributes {dimension_semantics = [#tpu.dimension_semantics<parallel>], iteration_bounds = array<i64: 1>, scalar_prefetch = 0 : i64, scratch_operands = 0 : i64, tpu.core_type = #tpu.core_type<tc>, window_params = [{transform_indices = @transform_0, window_bounds = array<i64: 4, 128>}, {pipeline_mode = #tpu.pipeline_mode<synchronous>, transform_indices = @transform_1, window_bounds = array<i64: 4, 4>}, {pipeline_mode = #tpu.pipeline_mode<synchronous>, transform_indices = @transform_2, window_bounds = array<i64: 4, 1>}, {pipeline_mode = #tpu.pipeline_mode<synchronous>, transform_indices = @transform_3, window_bounds = array<i64: 4, 4>}, {pipeline_mode = #tpu.pipeline_mode<synchronous>, transform_indices = @transform_4, window_bounds = array<i64: 4, 1>}, {pipeline_mode = #tpu.pipeline_mode<synchronous>, transform_indices = @transform_5, window_bounds = array<i64: 4, 4>}, {pipeline_mode = #tpu.pipeline_mode<synchronous>, transform_indices = @transform_6, window_bounds = array<i64: 4, 1>}, {pipeline_mode = #tpu.pipeline_mode<synchronous>, transform_indices = @transform_7, window_bounds = array<i64: 8, 4>}, {pipeline_mode = #tpu.pipeline_mode<synchronous>, transform_indices = @transform_8, window_bounds = array<i64: 8, 1>}, {transform_indices = @transform_9, window_bounds = array<i64: 4, 128>}, {transform_indices = @transform_10, window_bounds = array<i64: 1, 128>}]} {
    %c0 = arith.constant 0 : index
    %c0_0 = arith.constant 0 : index
    %0 = vector.load %arg1[%c0, %c0_0] : memref<4x128xf32, #tpu.memory_space<vmem>>, vector<4x128xf32>
    %c0_1 = arith.constant 0 : index
    %c0_2 = arith.constant 0 : index
    %1 = vector.load %arg2[%c0_1, %c0_2] : memref<4x4xf32, #tpu.memory_space<vmem>>, vector<4x4xf32>
    %c0_3 = arith.constant 0 : index
    %c0_4 = arith.constant 0 : index
    %2 = vector.load %arg3[%c0_3, %c0_4] : memref<4x1xf32, #tpu.memory_space<vmem>>, vector<4x1xf32>
    %3 = vector.extract_strided_slice %1 {offsets = [0, 0], sizes = [4, 1], strides = [1, 1]} : vector<4x4xf32> to vector<4x1xf32>
    %4 = vector.extract_strided_slice %0 {offsets = [0, 0], sizes = [1, 128], strides = [1, 1]} : vector<4x128xf32> to vector<1x128xf32>
    %5 = vector.broadcast %3 : vector<4x1xf32> to vector<4x128xf32>
    %6 = vector.broadcast %4 : vector<1x128xf32> to vector<4x128xf32>
    %7 = arith.mulf %5, %6 : vector<4x128xf32>
    %8 = vector.broadcast %2 : vector<4x1xf32> to vector<4x128xf32>
    %9 = arith.addf %8, %7 : vector<4x128xf32>
    %10 = vector.extract_strided_slice %1 {offsets = [0, 1], sizes = [4, 1], strides = [1, 1]} : vector<4x4xf32> to vector<4x1xf32>
    %11 = vector.extract_strided_slice %0 {offsets = [1, 0], sizes = [1, 128], strides = [1, 1]} : vector<4x128xf32> to vector<1x128xf32>
    %12 = vector.broadcast %10 : vector<4x1xf32> to vector<4x128xf32>
    %13 = vector.broadcast %11 : vector<1x128xf32> to vector<4x128xf32>
    %14 = arith.mulf %12, %13 : vector<4x128xf32>
    %15 = arith.addf %9, %14 : vector<4x128xf32>
    %16 = vector.extract_strided_slice %1 {offsets = [0, 2], sizes = [4, 1], strides = [1, 1]} : vector<4x4xf32> to vector<4x1xf32>
    %17 = vector.extract_strided_slice %0 {offsets = [2, 0], sizes = [1, 128], strides = [1, 1]} : vector<4x128xf32> to vector<1x128xf32>
    %18 = vector.broadcast %16 : vector<4x1xf32> to vector<4x128xf32>
    %19 = vector.broadcast %17 : vector<1x128xf32> to vector<4x128xf32>
    %20 = arith.mulf %18, %19 : vector<4x128xf32>
    %21 = arith.addf %15, %20 : vector<4x128xf32>
    %22 = vector.extract_strided_slice %1 {offsets = [0, 3], sizes = [4, 1], strides = [1, 1]} : vector<4x4xf32> to vector<4x1xf32>
    %23 = vector.extract_strided_slice %0 {offsets = [3, 0], sizes = [1, 128], strides = [1, 1]} : vector<4x128xf32> to vector<1x128xf32>
    %24 = vector.broadcast %22 : vector<4x1xf32> to vector<4x128xf32>
    %25 = vector.broadcast %23 : vector<1x128xf32> to vector<4x128xf32>
    %26 = arith.mulf %24, %25 : vector<4x128xf32>
    %27 = arith.addf %21, %26 : vector<4x128xf32>
    %28 = math.tanh %27 : vector<4x128xf32>
    %c0_5 = arith.constant 0 : index
    %c0_6 = arith.constant 0 : index
    %29 = vector.load %arg4[%c0_5, %c0_6] : memref<4x4xf32, #tpu.memory_space<vmem>>, vector<4x4xf32>
    %c0_7 = arith.constant 0 : index
    %c0_8 = arith.constant 0 : index
    %30 = vector.load %arg5[%c0_7, %c0_8] : memref<4x1xf32, #tpu.memory_space<vmem>>, vector<4x1xf32>
    %31 = vector.extract_strided_slice %29 {offsets = [0, 0], sizes = [4, 1], strides = [1, 1]} : vector<4x4xf32> to vector<4x1xf32>
    %32 = vector.extract_strided_slice %28 {offsets = [0, 0], sizes = [1, 128], strides = [1, 1]} : vector<4x128xf32> to vector<1x128xf32>
    %33 = vector.broadcast %31 : vector<4x1xf32> to vector<4x128xf32>
    %34 = vector.broadcast %32 : vector<1x128xf32> to vector<4x128xf32>
    %35 = arith.mulf %33, %34 : vector<4x128xf32>
    %36 = vector.broadcast %30 : vector<4x1xf32> to vector<4x128xf32>
    %37 = arith.addf %36, %35 : vector<4x128xf32>
    %38 = vector.extract_strided_slice %29 {offsets = [0, 1], sizes = [4, 1], strides = [1, 1]} : vector<4x4xf32> to vector<4x1xf32>
    %39 = vector.extract_strided_slice %28 {offsets = [1, 0], sizes = [1, 128], strides = [1, 1]} : vector<4x128xf32> to vector<1x128xf32>
    %40 = vector.broadcast %38 : vector<4x1xf32> to vector<4x128xf32>
    %41 = vector.broadcast %39 : vector<1x128xf32> to vector<4x128xf32>
    %42 = arith.mulf %40, %41 : vector<4x128xf32>
    %43 = arith.addf %37, %42 : vector<4x128xf32>
    %44 = vector.extract_strided_slice %29 {offsets = [0, 2], sizes = [4, 1], strides = [1, 1]} : vector<4x4xf32> to vector<4x1xf32>
    %45 = vector.extract_strided_slice %28 {offsets = [2, 0], sizes = [1, 128], strides = [1, 1]} : vector<4x128xf32> to vector<1x128xf32>
    %46 = vector.broadcast %44 : vector<4x1xf32> to vector<4x128xf32>
    %47 = vector.broadcast %45 : vector<1x128xf32> to vector<4x128xf32>
    %48 = arith.mulf %46, %47 : vector<4x128xf32>
    %49 = arith.addf %43, %48 : vector<4x128xf32>
    %50 = vector.extract_strided_slice %29 {offsets = [0, 3], sizes = [4, 1], strides = [1, 1]} : vector<4x4xf32> to vector<4x1xf32>
    %51 = vector.extract_strided_slice %28 {offsets = [3, 0], sizes = [1, 128], strides = [1, 1]} : vector<4x128xf32> to vector<1x128xf32>
    %52 = vector.broadcast %50 : vector<4x1xf32> to vector<4x128xf32>
    %53 = vector.broadcast %51 : vector<1x128xf32> to vector<4x128xf32>
    %54 = arith.mulf %52, %53 : vector<4x128xf32>
    %55 = arith.addf %49, %54 : vector<4x128xf32>
    %56 = math.tanh %55 : vector<4x128xf32>
    %c0_9 = arith.constant 0 : index
    %c0_10 = arith.constant 0 : index
    %57 = vector.load %arg6[%c0_9, %c0_10] : memref<4x4xf32, #tpu.memory_space<vmem>>, vector<4x4xf32>
    %c0_11 = arith.constant 0 : index
    %c0_12 = arith.constant 0 : index
    %58 = vector.load %arg7[%c0_11, %c0_12] : memref<4x1xf32, #tpu.memory_space<vmem>>, vector<4x1xf32>
    %59 = vector.extract_strided_slice %57 {offsets = [0, 0], sizes = [4, 1], strides = [1, 1]} : vector<4x4xf32> to vector<4x1xf32>
    %60 = vector.extract_strided_slice %56 {offsets = [0, 0], sizes = [1, 128], strides = [1, 1]} : vector<4x128xf32> to vector<1x128xf32>
    %61 = vector.broadcast %59 : vector<4x1xf32> to vector<4x128xf32>
    %62 = vector.broadcast %60 : vector<1x128xf32> to vector<4x128xf32>
    %63 = arith.mulf %61, %62 : vector<4x128xf32>
    %64 = vector.broadcast %58 : vector<4x1xf32> to vector<4x128xf32>
    %65 = arith.addf %64, %63 : vector<4x128xf32>
    %66 = vector.extract_strided_slice %57 {offsets = [0, 1], sizes = [4, 1], strides = [1, 1]} : vector<4x4xf32> to vector<4x1xf32>
    %67 = vector.extract_strided_slice %56 {offsets = [1, 0], sizes = [1, 128], strides = [1, 1]} : vector<4x128xf32> to vector<1x128xf32>
    %68 = vector.broadcast %66 : vector<4x1xf32> to vector<4x128xf32>
    %69 = vector.broadcast %67 : vector<1x128xf32> to vector<4x128xf32>
    %70 = arith.mulf %68, %69 : vector<4x128xf32>
    %71 = arith.addf %65, %70 : vector<4x128xf32>
    %72 = vector.extract_strided_slice %57 {offsets = [0, 2], sizes = [4, 1], strides = [1, 1]} : vector<4x4xf32> to vector<4x1xf32>
    %73 = vector.extract_strided_slice %56 {offsets = [2, 0], sizes = [1, 128], strides = [1, 1]} : vector<4x128xf32> to vector<1x128xf32>
    %74 = vector.broadcast %72 : vector<4x1xf32> to vector<4x128xf32>
    %75 = vector.broadcast %73 : vector<1x128xf32> to vector<4x128xf32>
    %76 = arith.mulf %74, %75 : vector<4x128xf32>
    %77 = arith.addf %71, %76 : vector<4x128xf32>
    %78 = vector.extract_strided_slice %57 {offsets = [0, 3], sizes = [4, 1], strides = [1, 1]} : vector<4x4xf32> to vector<4x1xf32>
    %79 = vector.extract_strided_slice %56 {offsets = [3, 0], sizes = [1, 128], strides = [1, 1]} : vector<4x128xf32> to vector<1x128xf32>
    %80 = vector.broadcast %78 : vector<4x1xf32> to vector<4x128xf32>
    %81 = vector.broadcast %79 : vector<1x128xf32> to vector<4x128xf32>
    %82 = arith.mulf %80, %81 : vector<4x128xf32>
    %83 = arith.addf %77, %82 : vector<4x128xf32>
    %84 = math.tanh %83 : vector<4x128xf32>
    %c0_13 = arith.constant 0 : index
    %c0_14 = arith.constant 0 : index
    %85 = vector.load %arg8[%c0_13, %c0_14] : memref<8x4xf32, #tpu.memory_space<vmem>>, vector<8x4xf32>
    %c0_15 = arith.constant 0 : index
    %c0_16 = arith.constant 0 : index
    %86 = vector.load %arg9[%c0_15, %c0_16] : memref<8x1xf32, #tpu.memory_space<vmem>>, vector<8x1xf32>
    %87 = vector.extract_strided_slice %85 {offsets = [0, 0], sizes = [8, 1], strides = [1, 1]} : vector<8x4xf32> to vector<8x1xf32>
    %88 = vector.extract_strided_slice %84 {offsets = [0, 0], sizes = [1, 128], strides = [1, 1]} : vector<4x128xf32> to vector<1x128xf32>
    %89 = vector.broadcast %87 : vector<8x1xf32> to vector<8x128xf32>
    %90 = vector.broadcast %88 : vector<1x128xf32> to vector<8x128xf32>
    %91 = arith.mulf %89, %90 : vector<8x128xf32>
    %92 = vector.broadcast %86 : vector<8x1xf32> to vector<8x128xf32>
    %93 = arith.addf %92, %91 : vector<8x128xf32>
    %94 = vector.extract_strided_slice %85 {offsets = [0, 1], sizes = [8, 1], strides = [1, 1]} : vector<8x4xf32> to vector<8x1xf32>
    %95 = vector.extract_strided_slice %84 {offsets = [1, 0], sizes = [1, 128], strides = [1, 1]} : vector<4x128xf32> to vector<1x128xf32>
    %96 = vector.broadcast %94 : vector<8x1xf32> to vector<8x128xf32>
    %97 = vector.broadcast %95 : vector<1x128xf32> to vector<8x128xf32>
    %98 = arith.mulf %96, %97 : vector<8x128xf32>
    %99 = arith.addf %93, %98 : vector<8x128xf32>
    %100 = vector.extract_strided_slice %85 {offsets = [0, 2], sizes = [8, 1], strides = [1, 1]} : vector<8x4xf32> to vector<8x1xf32>
    %101 = vector.extract_strided_slice %84 {offsets = [2, 0], sizes = [1, 128], strides = [1, 1]} : vector<4x128xf32> to vector<1x128xf32>
    %102 = vector.broadcast %100 : vector<8x1xf32> to vector<8x128xf32>
    %103 = vector.broadcast %101 : vector<1x128xf32> to vector<8x128xf32>
    %104 = arith.mulf %102, %103 : vector<8x128xf32>
    %105 = arith.addf %99, %104 : vector<8x128xf32>
    %106 = vector.extract_strided_slice %85 {offsets = [0, 3], sizes = [8, 1], strides = [1, 1]} : vector<8x4xf32> to vector<8x1xf32>
    %107 = vector.extract_strided_slice %84 {offsets = [3, 0], sizes = [1, 128], strides = [1, 1]} : vector<4x128xf32> to vector<1x128xf32>
    %108 = vector.broadcast %106 : vector<8x1xf32> to vector<8x128xf32>
    %109 = vector.broadcast %107 : vector<1x128xf32> to vector<8x128xf32>
    %110 = arith.mulf %108, %109 : vector<8x128xf32>
    %111 = arith.addf %105, %110 : vector<8x128xf32>
    %112 = vector.extract_strided_slice %111 {offsets = [0, 0], sizes = [4, 128], strides = [1, 1]} : vector<8x128xf32> to vector<4x128xf32>
    %113 = vector.extract_strided_slice %111 {offsets = [4, 0], sizes = [4, 128], strides = [1, 1]} : vector<8x128xf32> to vector<4x128xf32>
    %cst = arith.constant dense<0xFF800000> : vector<128xf32>
    %114 = vector.multi_reduction <maximumf>, %112, %cst [0] : vector<4x128xf32> to vector<128xf32>
    %115 = vector.shape_cast %114 : vector<128xf32> to vector<1x128xf32>
    %116 = vector.broadcast %115 : vector<1x128xf32> to vector<4x128xf32>
    %117 = arith.subf %112, %116 : vector<4x128xf32>
    %118 = math.exp %117 : vector<4x128xf32>
    %cst_17 = arith.constant dense<0.000000e+00> : vector<128xf32>
    %119 = vector.multi_reduction <add>, %118, %cst_17 [0] : vector<4x128xf32> to vector<128xf32>
    %120 = vector.shape_cast %119 : vector<128xf32> to vector<1x128xf32>
    %121 = tpu.reciprocal %120 : vector<1x128xf32> -> vector<1x128xf32>
    %122 = vector.broadcast %121 : vector<1x128xf32> to vector<4x128xf32>
    %123 = arith.mulf %118, %122 : vector<4x128xf32>
    %c0_18 = arith.constant 0 : index
    %c0_19 = arith.constant 0 : index
    %124 = vector.load %arg10[%c0_18, %c0_19] : memref<4x128xf32, #tpu.memory_space<vmem>>, vector<4x128xf32>
    tpu.vector_store %arg10[%c0_18, %c0_19], %123 {strides = array<i32>} : memref<4x128xf32, #tpu.memory_space<vmem>>, vector<4x128xf32>,
    %cst_20 = arith.constant dense<0xFF800000> : vector<128xf32>
    %125 = vector.multi_reduction <maximumf>, %113, %cst_20 [0] : vector<4x128xf32> to vector<128xf32>
    %126 = vector.shape_cast %125 : vector<128xf32> to vector<1x128xf32>
    %c0_21 = arith.constant 0 : index
    %c0_22 = arith.constant 0 : index
    %127 = vector.load %arg11[%c0_21, %c0_22] : memref<1x128xf32, #tpu.memory_space<vmem>>, vector<1x128xf32>
    tpu.vector_store %arg11[%c0_21, %c0_22], %126 {strides = array<i32>} : memref<1x128xf32, #tpu.memory_space<vmem>>, vector<1x128xf32>,
    return
  }
  func.func @transform_0(%arg0: i32) -> (i32, i32) {
    %c0_i32 = arith.constant 0 : i32
    %c0_i32_0 = arith.constant 0 : i32
    return %c0_i32, %arg0 : i32, i32
  }
  func.func @transform_1(%arg0: i32) -> (i32, i32) {
    %c0_i32 = arith.constant 0 : i32
    %c0_i32_0 = arith.constant 0 : i32
    %c0_i32_1 = arith.constant 0 : i32
    return %c0_i32, %c0_i32_0 : i32, i32
  }
  func.func @transform_2(%arg0: i32) -> (i32, i32) {
    %c0_i32 = arith.constant 0 : i32
    %c0_i32_0 = arith.constant 0 : i32
    %c0_i32_1 = arith.constant 0 : i32
    return %c0_i32, %c0_i32_0 : i32, i32
  }
  func.func @transform_3(%arg0: i32) -> (i32, i32) {
    %c0_i32 = arith.constant 0 : i32
    %c0_i32_0 = arith.constant 0 : i32
    %c0_i32_1 = arith.constant 0 : i32
    return %c0_i32, %c0_i32_0 : i32, i32
  }
  func.func @transform_4(%arg0: i32) -> (i32, i32) {
    %c0_i32 = arith.constant 0 : i32
    %c0_i32_0 = arith.constant 0 : i32
    %c0_i32_1 = arith.constant 0 : i32
    return %c0_i32, %c0_i32_0 : i32, i32
  }
  func.func @transform_5(%arg0: i32) -> (i32, i32) {
    %c0_i32 = arith.constant 0 : i32
    %c0_i32_0 = arith.constant 0 : i32
    %c0_i32_1 = arith.constant 0 : i32
    return %c0_i32, %c0_i32_0 : i32, i32
  }
  func.func @transform_6(%arg0: i32) -> (i32, i32) {
    %c0_i32 = arith.constant 0 : i32
    %c0_i32_0 = arith.constant 0 : i32
    %c0_i32_1 = arith.constant 0 : i32
    return %c0_i32, %c0_i32_0 : i32, i32
  }
  func.func @transform_7(%arg0: i32) -> (i32, i32) {
    %c0_i32 = arith.constant 0 : i32
    %c0_i32_0 = arith.constant 0 : i32
    %c0_i32_1 = arith.constant 0 : i32
    return %c0_i32, %c0_i32_0 : i32, i32
  }
  func.func @transform_8(%arg0: i32) -> (i32, i32) {
    %c0_i32 = arith.constant 0 : i32
    %c0_i32_0 = arith.constant 0 : i32
    %c0_i32_1 = arith.constant 0 : i32
    return %c0_i32, %c0_i32_0 : i32, i32
  }
  func.func @transform_9(%arg0: i32) -> (i32, i32) {
    %c0_i32 = arith.constant 0 : i32
    %c0_i32_0 = arith.constant 0 : i32
    return %c0_i32, %arg0 : i32, i32
  }
  func.func @transform_10(%arg0: i32) -> (i32, i32) {
    %c0_i32 = arith.constant 0 : i32
    %c0_i32_0 = arith.constant 0 : i32
    return %c0_i32, %arg0 : i32, i32
  }
}

</mosaic_0001>

<llo_original>
// kernel: policy_network_forward.1
$region0: #{policy_network_forward.1}
  #allocation0 [shape = 'u32[]', space=smem, size = 0x4, offset = 0x4, fixed_abs, tag = 'smem constant byte address 0x4 - core index']
  #allocation1 [shape = 'u32[144,128]{1,0:T(1,128)}', space=vmem, size = 0x12000, scoped, tag = 'internal scratch']
  %s0 = inlined_call_operand.vmem [shape: f32[4,128], index: 0, kind: input, shape index: {}]
  %s1 = inlined_call_operand.vmem [shape: f32[4,4], index: 1, kind: input, shape index: {}]
  %s2 = inlined_call_operand.vmem [shape: f32[4,1], index: 2, kind: input, shape index: {}]
  %s3 = inlined_call_operand.vmem [shape: f32[4,4], index: 3, kind: input, shape index: {}]
  %s4 = inlined_call_operand.vmem [shape: f32[4,1], index: 4, kind: input, shape index: {}]
  %s5 = inlined_call_operand.vmem [shape: f32[4,4], index: 5, kind: input, shape index: {}]
  %s6 = inlined_call_operand.vmem [shape: f32[4,1], index: 6, kind: input, shape index: {}]
  %s7 = inlined_call_operand.vmem [shape: f32[8,4], index: 7, kind: input, shape index: {}]
  %s8 = inlined_call_operand.vmem [shape: f32[8,1], index: 8, kind: input, shape index: {}]
  %s9 = inlined_call_operand.vmem [shape: f32[4,128], index: 9, kind: output, shape index: {0}]
  %s10 = inlined_call_operand.vmem [shape: f32[1,128], index: 10, kind: output, shape index: {1}]
  %11 = xla_tuple %s9, %s10
  %s12 = sld [smem:[#allocation0]]
  $region54: #{policy_network_forward.1} parent=0
    _
  %s14 = ssub.s32 1, %s12
  %s15 = scalar_select 0, %s14, %s12
  // Predicated region
  $region2: #{policy_network_forward.1} parent=0 // pred_check
    _
  $region3: #{policy_network_forward.1} parent=0 // pred_check_branch
    %17 = sbr.rel (0) target = $region5
  $region4: #{policy_network_forward.1} parent=0 // pred_region
    _
  $region5: #{policy_network_forward.1} parent=0 // pred_fallthru
    _
  // Predicated region
  $region6: #{policy_network_forward.1} parent=0 // pred_check
    _
  $region7: #{policy_network_forward.1} parent=0 // pred_check_branch
    %19 = sbr.rel (0) target = $region9
  $region8: #{policy_network_forward.1} parent=0 // pred_region
    _
  $region9: #{policy_network_forward.1} parent=0 // pred_fallthru
    _
  // Predicated region
  $region10: #{policy_network_forward.1} parent=0 // pred_check
    _
  $region11: #{policy_network_forward.1} parent=0 // pred_check_branch
    %21 = sbr.rel (0) target = $region13
  $region12: #{policy_network_forward.1} parent=0 // pred_region
    _
  $region13: #{policy_network_forward.1} parent=0 // pred_fallthru
    _
  // Predicated region
  $region14: #{policy_network_forward.1} parent=0 // pred_check
    _
  $region15: #{policy_network_forward.1} parent=0 // pred_check_branch
    %23 = sbr.rel (0) target = $region17
  $region16: #{policy_network_forward.1} parent=0 // pred_region
    _
  $region17: #{policy_network_forward.1} parent=0 // pred_fallthru
    _
  // Predicated region
  $region18: #{policy_network_forward.1} parent=0 // pred_check
    _
  $region19: #{policy_network_forward.1} parent=0 // pred_check_branch
    %25 = sbr.rel (0) target = $region21
  $region20: #{policy_network_forward.1} parent=0 // pred_region
    _
  $region21: #{policy_network_forward.1} parent=0 // pred_fallthru
    _
  // Predicated region
  $region22: #{policy_network_forward.1} parent=0 // pred_check
    _
  $region23: #{policy_network_forward.1} parent=0 // pred_check_branch
    %27 = sbr.rel (0) target = $region25
  $region24: #{policy_network_forward.1} parent=0 // pred_region
    _
  $region25: #{policy_network_forward.1} parent=0 // pred_fallthru
    _
  // Predicated region
  $region26: #{policy_network_forward.1} parent=0 // pred_check
    _
  $region27: #{policy_network_forward.1} parent=0 // pred_check_branch
    %29 = sbr.rel (0) target = $region29
  $region28: #{policy_network_forward.1} parent=0 // pred_region
    _
  $region29: #{policy_network_forward.1} parent=0 // pred_fallthru
    _
  // Predicated region
  $region30: #{policy_network_forward.1} parent=0 // pred_check
    _
  $region31: #{policy_network_forward.1} parent=0 // pred_check_branch
    %31 = sbr.rel (0) target = $region33
  $region32: #{policy_network_forward.1} parent=0 // pred_region
    _
  $region33: #{policy_network_forward.1} parent=0 // pred_fallthru
    _
  // Predicated region
  $region34: #{policy_network_forward.1} parent=0 // pred_check
    _
  $region35: #{policy_network_forward.1} parent=0 // pred_check_branch
    %33 = sbr.rel (0) target = $region37
  $region36: #{policy_network_forward.1} parent=0 // pred_region
    _
  $region37: #{policy_network_forward.1} parent=0 // pred_fallthru
    _
  %v34 = vld [vmem:[%s0] sm:$0xf]
  %v35 = vld [vmem:[%s1] sm:$0xf]
  %v36 = vld [vmem:[%s2] sm:$0xf]
  %38 = vset.pattern.permute.xlu0 0
  %39 = vperm.xlu0 %38, %v35
  %v40 = vpop.permute.xlu0 %39
  %v42 = vlaneseq
  %v43 = vshrl.u32 %v42, 7
  %v44 = vsub.s32 0, %v43
  %v45 = vrot.slane %v34, %v44
  %v46 = vmul.f32 %v40, %v45
  %48 = vset.pattern.permute.xlu0 0
  %49 = vperm.xlu0 %48, %v36
  %v50 = vpop.permute.xlu0 %49
  %v52 = vadd.f32 %v50, %v46
  %53 = vset.pattern.permute.xlu0 1
  %54 = vperm.xlu0 %53, %v35
  %v55 = vpop.permute.xlu0 %54
  %v57 = vlaneseq
  %v58 = vshrl.u32 %v57, 7
  %v59 = vsub.s32 1, %v58
  %v60 = vrot.slane %v34, %v59
  %v61 = vmul.f32 %v55, %v60
  %v62 = vadd.f32 %v52, %v61
  %63 = vset.pattern.permute.xlu0 2
  %64 = vperm.xlu0 %63, %v35
  %v65 = vpop.permute.xlu0 %64
  %v67 = vlaneseq
  %v68 = vshrl.u32 %v67, 7
  %v69 = vsub.s32 2, %v68
  %v70 = vrot.slane %v34, %v69
  %v71 = vmul.f32 %v65, %v70
  %v72 = vadd.f32 %v62, %v71
  %73 = vset.pattern.permute.xlu0 3
  %74 = vperm.xlu0 %73, %v35
  %v75 = vpop.permute.xlu0 %74
  %v77 = vlaneseq
  %v78 = vshrl.u32 %v77, 7
  %v79 = vsub.s32 3, %v78
  %v80 = vrot.slane %v34, %v79
  %v81 = vmul.f32 %v75, %v80
  %v82 = vadd.f32 %v72, %v81
  %v83 = vtanh.pop %v82
  %v84 = vld [vmem:[%s3] sm:$0xf]
  %v85 = vld [vmem:[%s4] sm:$0xf]
  %87 = vset.pattern.permute.xlu0 0
  %88 = vperm.xlu0 %87, %v84
  %v89 = vpop.permute.xlu0 %88
  %v91 = vlaneseq
  %v92 = vshrl.u32 %v91, 7
  %v93 = vsub.s32 0, %v92
  %v94 = vrot.slane %v83, %v93
  %v95 = vmul.f32 %v89, %v94
  %97 = vset.pattern.permute.xlu0 0
  %98 = vperm.xlu0 %97, %v85
  %v99 = vpop.permute.xlu0 %98
  %v101 = vadd.f32 %v99, %v95
  %102 = vset.pattern.permute.xlu0 1
  %103 = vperm.xlu0 %102, %v84
  %v104 = vpop.permute.xlu0 %103
  %v106 = vlaneseq
  %v107 = vshrl.u32 %v106, 7
  %v108 = vsub.s32 1, %v107
  %v109 = vrot.slane %v83, %v108
  %v110 = vmul.f32 %v104, %v109
  %v111 = vadd.f32 %v101, %v110
  %112 = vset.pattern.permute.xlu0 2
  %113 = vperm.xlu0 %112, %v84
  %v114 = vpop.permute.xlu0 %113
  %v116 = vlaneseq
  %v117 = vshrl.u32 %v116, 7
  %v118 = vsub.s32 2, %v117
  %v119 = vrot.slane %v83, %v118
  %v120 = vmul.f32 %v114, %v119
  %v121 = vadd.f32 %v111, %v120
  %122 = vset.pattern.permute.xlu0 3
  %123 = vperm.xlu0 %122, %v84
  %v124 = vpop.permute.xlu0 %123
  %v126 = vlaneseq
  %v127 = vshrl.u32 %v126, 7
  %v128 = vsub.s32 3, %v127
  %v129 = vrot.slane %v83, %v128
  %v130 = vmul.f32 %v124, %v129
  %v131 = vadd.f32 %v121, %v130
  %v132 = vtanh.pop %v131
  %v133 = vld [vmem:[%s5] sm:$0xf]
  %v134 = vld [vmem:[%s6] sm:$0xf]
  %136 = vset.pattern.permute.xlu0 0
  %137 = vperm.xlu0 %136, %v133
  %v138 = vpop.permute.xlu0 %137
  %v140 = vlaneseq
  %v141 = vshrl.u32 %v140, 7
  %v142 = vsub.s32 0, %v141
  %v143 = vrot.slane %v132, %v142
  %v144 = vmul.f32 %v138, %v143
  %146 = vset.pattern.permute.xlu0 0
  %147 = vperm.xlu0 %146, %v134
  %v148 = vpop.permute.xlu0 %147
  %v150 = vadd.f32 %v148, %v144
  %151 = vset.pattern.permute.xlu0 1
  %152 = vperm.xlu0 %151, %v133
  %v153 = vpop.permute.xlu0 %152
  %v155 = vlaneseq
  %v156 = vshrl.u32 %v155, 7
  %v157 = vsub.s32 1, %v156
  %v158 = vrot.slane %v132, %v157
  %v159 = vmul.f32 %v153, %v158
  %v160 = vadd.f32 %v150, %v159
  %161 = vset.pattern.permute.xlu0 2
  %162 = vperm.xlu0 %161, %v133
  %v163 = vpop.permute.xlu0 %162
  %v165 = vlaneseq
  %v166 = vshrl.u32 %v165, 7
  %v167 = vsub.s32 2, %v166
  %v168 = vrot.slane %v132, %v167
  %v169 = vmul.f32 %v163, %v168
  %v170 = vadd.f32 %v160, %v169
  %171 = vset.pattern.permute.xlu0 3
  %172 = vperm.xlu0 %171, %v133
  %v173 = vpop.permute.xlu0 %172
  %v175 = vlaneseq
  %v176 = vshrl.u32 %v175, 7
  %v177 = vsub.s32 3, %v176
  %v178 = vrot.slane %v132, %v177
  %v179 = vmul.f32 %v173, %v178
  %v180 = vadd.f32 %v170, %v179
  %v181 = vtanh.pop %v180
  %v182 = vld [vmem:[%s7] sm:$0xff]
  %v183 = vld [vmem:[%s8] sm:$0xff]
  %185 = vset.pattern.permute.xlu0 0
  %186 = vperm.xlu0 %185, %v182
  %v187 = vpop.permute.xlu0 %186
  %v189 = vlaneseq
  %v190 = vshrl.u32 %v189, 7
  %v191 = vsub.s32 0, %v190
  %v192 = vrot.slane %v181, %v191
  %v193 = vmul.f32 %v187, %v192
  %195 = vset.pattern.permute.xlu0 0
  %196 = vperm.xlu0 %195, %v183
  %v197 = vpop.permute.xlu0 %196
  %v199 = vadd.f32 %v197, %v193
  %200 = vset.pattern.permute.xlu0 1
  %201 = vperm.xlu0 %200, %v182
  %v202 = vpop.permute.xlu0 %201
  %v204 = vlaneseq
  %v205 = vshrl.u32 %v204, 7
  %v206 = vsub.s32 1, %v205
  %v207 = vrot.slane %v181, %v206
  %v208 = vmul.f32 %v202, %v207
  %v209 = vadd.f32 %v199, %v208
  %210 = vset.pattern.permute.xlu0 2
  %211 = vperm.xlu0 %210, %v182
  %v212 = vpop.permute.xlu0 %211
  %v214 = vlaneseq
  %v215 = vshrl.u32 %v214, 7
  %v216 = vsub.s32 2, %v215
  %v217 = vrot.slane %v181, %v216
  %v218 = vmul.f32 %v212, %v217
  %v219 = vadd.f32 %v209, %v218
  %220 = vset.pattern.permute.xlu0 3
  %221 = vperm.xlu0 %220, %v182
  %v222 = vpop.permute.xlu0 %221
  %v224 = vlaneseq
  %v225 = vshrl.u32 %v224, 7
  %v226 = vsub.s32 3, %v225
  %v227 = vrot.slane %v181, %v226
  %v228 = vmul.f32 %v222, %v227
  %v229 = vadd.f32 %v219, %v228
  %vm230 = vcmask 1043456
  %v231 = vsel %vm230, %v229, -inf
  %v232 = vrot.slane %v231, 4
  %v233 = vmax.f32 %v231, %v232
  %v234 = vrot.slane %v233, 2
  %v235 = vmax.f32 %v233, %v234
  %v236 = vrot.slane %v235, 1
  %v237 = vmax.f32 %v235, %v236
  %v238 = vsub.f32 %v229, %v237
  %v239 = vmul.f32 %v238, 1.442695
  %v240 = vpow.pop %v239
  %v241 = vsel %vm230, %v240, 0.0
  %v242 = vrot.slane %v241, 4
  %v243 = vadd.f32 %v241, %v242
  %v244 = vrot.slane %v243, 2
  %v245 = vadd.f32 %v243, %v244
  %v246 = vrot.slane %v245, 1
  %v247 = vadd.f32 %v245, %v246
  %v248 = vrcp.pop %v247
  %v249 = vmul.f32 %v240, %v248
  %250 = vst [vmem:[%s9] sm:$0xf] %v249
  %vm251 = vcmask 1047556
  %v252 = vsel %vm251, %v229, -inf
  %v253 = vrot.slane %v252, 4
  %v254 = vmax.f32 %v252, %v253
  %v255 = vrot.slane %v254, 2
  %v256 = vmax.f32 %v254, %v255
  %v257 = vrot.slane %v256, 1
  %v258 = vmax.f32 %v256, %v257
  %259 = vst [vmem:[%s10] sm:$0x1] %v258
  // Predicated region
  $region38: #{policy_network_forward.1} parent=0 // pred_check
    _
  $region39: #{policy_network_forward.1} parent=0 // pred_check_branch
    %261 = sbr.rel (0) target = $region41
  $region40: #{policy_network_forward.1} parent=0 // pred_region
    _
  $region41: #{policy_network_forward.1} parent=0 // pred_fallthru
    _
  // Predicated region
  $region42: #{policy_network_forward.1} parent=0 // pred_check
    _
  $region43: #{policy_network_forward.1} parent=0 // pred_check_branch
    %263 = sbr.rel (0) target = $region45
  $region44: #{policy_network_forward.1} parent=0 // pred_region
    _
  $region45: #{policy_network_forward.1} parent=0 // pred_fallthru
    _
  // Predicated region
  $region46: #{policy_network_forward.1} parent=0 // pred_check
    _
  $region47: #{policy_network_forward.1} parent=0 // pred_check_branch
    %265 = sbr.rel (0) target = $region49
  $region48: #{policy_network_forward.1} parent=0 // pred_region
    _
  $region49: #{policy_network_forward.1} parent=0 // pred_fallthru
    _
  // Predicated region
  $region50: #{policy_network_forward.1} parent=0 // pred_check
    _
  $region51: #{policy_network_forward.1} parent=0 // pred_check_branch
    %267 = sbr.rel (0) target = $region53
  $region52: #{policy_network_forward.1} parent=0 // pred_region
    _
  $region53: #{policy_network_forward.1} parent=0 // pred_fallthru
    _

</llo_original>
